<compile_context>
chip_gen: v7x
topology: tpu7x:2x2x1
jax: 0.10.0
libtpu: 0.0.40
codegen_flags: <defaults>
</compile_context>

<pallas_src>
import functools

import jax
import jax.numpy as jnp
from jax.experimental import pallas as pl
from jax.experimental.pallas import tpu as pltpu


def _kpshift_kernel(x_ref, w1_ref, b1_ref, w2_ref, b2_ref, w3_ref, b3_ref,
                    o_ref, *, compute_dtype):
    # x_ref : (C_in, TL) float32 slab (batch dim squeezed); channels on
    #         sublanes, positions on lanes.  Cast to compute dtype in-kernel.
    # w*    : (H1, C_in), (H2, H1), (3, H2) in compute dtype (PyTorch Conv1d
    #         k=1 orientation) -> out = W @ x + b.
    # b*    : (H1, 1), (H2, 1), (3, 1) float32.
    # o_ref : (3, TL) float32, lane-dense, already NCL layout.
    x = x_ref[...].astype(compute_dtype)
    h1 = jnp.dot(w1_ref[...], x, preferred_element_type=jnp.float32) + b1_ref[...]
    h1 = jnp.maximum(h1, 0.0).astype(compute_dtype)
    h2 = jnp.dot(w2_ref[...], h1, preferred_element_type=jnp.float32) + b2_ref[...]
    h2 = jnp.maximum(h2, 0.0).astype(compute_dtype)
    out = jnp.dot(w3_ref[...], h2, preferred_element_type=jnp.float32) + b3_ref[...]
    o_ref[...] = out.astype(o_ref.dtype)


@functools.partial(jax.jit, static_argnames=("tile_l", "compute_dtype"))
def larmatch_kpshift_forward(triplet_feat, params, *, tile_l=8192,
                             compute_dtype=jnp.bfloat16):
    """triplet_feat: (N, C_in, L) float32 (PyTorch Conv1d NCL layout).

    Returns (N, 3, L) float32 — same semantics as the PyTorch module.
    compute_dtype=jnp.float32 is a validation-only path (3x MXU passes).
    """
    w1, b1, w2, b2, w3, b3 = params
    n, c_in, length = triplet_feat.shape
    d1 = w1.shape[0]
    d2 = w2.shape[0]
    c_out = w3.shape[0]

    # Lane (position) tile: multiple of 128, no larger than the rounded-up
    # sequence length.  No padding of the input — the last grid block may be
    # ragged and Pallas handles the partial read/write.
    l128 = max(128, ((length + 127) // 128) * 128)
    tl = max(128, (min(int(tile_l), l128) // 128) * 128)
    if n == 1:
        # v7x: keep >= 2 grid steps on the parallel L axis so both TCs work.
        half = max(128, ((-(-length // 2) + 127) // 128) * 128)
        tl = min(tl, half)
    grid = (n, pl.cdiv(length, tl))

    # Weights are tiny; cast once in the wrapper.  Biases stay f32.
    w1c = w1.astype(compute_dtype)
    w2c = w2.astype(compute_dtype)
    w3c = w3.astype(compute_dtype)
    b1f = b1.astype(jnp.float32)
    b2f = b2.astype(jnp.float32)
    b3f = b3.astype(jnp.float32)

    w_bytes = jnp.dtype(compute_dtype).itemsize
    flops = 2 * n * length * (c_in * d1 + d1 * d2 + d2 * c_out)
    bytes_accessed = (n * length * (c_in * 4 + c_out * 4)            # x read f32, out write f32
                      + (c_in * d1 + d1 * d2 + d2 * c_out) * w_bytes
                      + (d1 + d2 + c_out) * 4)

    kernel = functools.partial(_kpshift_kernel, compute_dtype=compute_dtype)

    out = pl.pallas_call(
        kernel,
        out_shape=jax.ShapeDtypeStruct((n, c_out, length), jnp.float32),
        grid_spec=pltpu.PrefetchScalarGridSpec(
            num_scalar_prefetch=0,
            grid=grid,
            in_specs=[
                # batch dim squeezed; channels on sublanes, positions on lanes
                pl.BlockSpec((None, c_in, tl), lambda b, i: (b, 0, i)),
                # weights/biases: same (0, 0) block every step -> VMEM-resident
                pl.BlockSpec((d1, c_in), lambda b, i: (0, 0)),
                pl.BlockSpec((d1, 1), lambda b, i: (0, 0)),
                pl.BlockSpec((d2, d1), lambda b, i: (0, 0)),
                pl.BlockSpec((d2, 1), lambda b, i: (0, 0)),
                pl.BlockSpec((c_out, d2), lambda b, i: (0, 0)),
                pl.BlockSpec((c_out, 1), lambda b, i: (0, 0)),
            ],
            out_specs=pl.BlockSpec((None, c_out, tl), lambda b, i: (b, 0, i)),
        ),
        compiler_params=pltpu.CompilerParams(
            dimension_semantics=("parallel", "parallel")),
        cost_estimate=pl.CostEstimate(flops=flops, transcendentals=0,
                                      bytes_accessed=bytes_accessed),
    )(triplet_feat, w1c, b1f, w2c, b2f, w3c, b3f)

    return out   # already (N, 3, L) — no pad to strip


def init_params(key, features_per_layer=16, kpshift_nfeatures=(64, 64),
                ninput_planes=3):
    """Deterministic synthetic parameters with the module's shapes.

    PyTorch Conv1d(k=1) weight is (C_out, C_in, 1); kept as (C_out, C_in)
    matrices and (C_out, 1) biases.  Init mimics PyTorch's default
    uniform(-1/sqrt(fan_in), 1/sqrt(fan_in)).
    """
    c_in = ninput_planes * features_per_layer
    dims = [c_in, kpshift_nfeatures[0], kpshift_nfeatures[1], 3]
    params = []
    for i in range(3):
        key, kw, kb = jax.random.split(key, 3)
        bound = 1.0 / float(dims[i]) ** 0.5
        w = jax.random.uniform(kw, (dims[i + 1], dims[i]), jnp.float32,
                               -bound, bound)
        b = jax.random.uniform(kb, (dims[i + 1], 1), jnp.float32,
                               -bound, bound)
        params.extend([w, b])
    return tuple(params)


def _reference_forward(triplet_feat, params, compute_dtype=jnp.float32):
    """Pure-JAX reference mirroring the kernel's per-layer dtype handling."""
    w1, b1, w2, b2, w3, b3 = params

    def layer(w, b, xin, relu):
        y = jnp.einsum("oc,ncl->nol", w.astype(compute_dtype), xin,
                       preferred_element_type=jnp.float32)
        y = y + b.astype(jnp.float32)
        if relu:
            y = jnp.maximum(y, 0.0)
        return y

    x = triplet_feat.astype(compute_dtype)
    h = layer(w1, b1, x, True).astype(compute_dtype)
    h = layer(w2, b2, h, True).astype(compute_dtype)
    o = layer(w3, b3, h, False)
    return o.astype(jnp.float32)


if __name__ == "__main__":
    key = jax.random.PRNGKey(0)
    params = init_params(key)
    c_in = 3 * 16   # module defaults: ninput_planes=3, features_per_layer=16

    # --- case 1: small canonical shape (batch=2, C_in=48, L=16) -------------
    key, kx = jax.random.split(key)
    x = jax.random.normal(kx, (2, c_in, 16), jnp.float32)
    out = jax.block_until_ready(larmatch_kpshift_forward(x, params))
    assert out.shape == (2, 3, 16), out.shape
    ref_bf16 = _reference_forward(x, params, compute_dtype=jnp.bfloat16)
    assert jnp.allclose(out, ref_bf16, atol=2e-3, rtol=2e-3), "bf16 mismatch"
    ref_f32 = _reference_forward(x, params, compute_dtype=jnp.float32)
    assert jnp.allclose(out, ref_f32, atol=5e-2, rtol=5e-2), "f32 drift"
    # Pure-f32 kernel path must match the f32 module semantics tightly.
    out_f32 = jax.block_until_ready(
        larmatch_kpshift_forward(x, params, compute_dtype=jnp.float32))
    assert jnp.allclose(out_f32, ref_f32, atol=1e-5, rtol=1e-5), "f32 mismatch"

    # --- case 2: ragged length, single partial block (L=300, default tile) --
    key, kx = jax.random.split(key)
    x2 = jax.random.normal(kx, (2, c_in, 300), jnp.float32)
    out2 = jax.block_until_ready(larmatch_kpshift_forward(x2, params))
    assert out2.shape == (2, 3, 300), out2.shape
    ref2 = _reference_forward(x2, params, compute_dtype=jnp.bfloat16)
    assert jnp.allclose(out2, ref2, atol=2e-3, rtol=2e-3), "ragged mismatch"

    # --- case 3: multiple tiles + partial last tile (L=300, tile_l=128) -----
    out3 = jax.block_until_ready(
        larmatch_kpshift_forward(x2, params, tile_l=128))
    assert out3.shape == (2, 3, 300), out3.shape
    assert jnp.allclose(out3, ref2, atol=2e-3, rtol=2e-3), "multi-tile mismatch"

    # --- case 4: N == 1 path (tile capped for v7x dual-core) ----------------
    key, kx = jax.random.split(key)
    x4 = jax.random.normal(kx, (1, c_in, 520), jnp.float32)
    out4 = jax.block_until_ready(larmatch_kpshift_forward(x4, params))
    ref4 = _reference_forward(x4, params, compute_dtype=jnp.bfloat16)
    assert out4.shape == (1, 3, 520), out4.shape
    assert jnp.allclose(out4, ref4, atol=2e-3, rtol=2e-3), "N=1 mismatch"

    print("KERNEL_OK")
</pallas_src>

<mosaic_0001>
module attributes {stable_mosaic.version = 11 : i64} {
  func.func @_kpshift_kernel(%arg0: i32, %arg1: i32, %arg2: memref<1x48x128xf32, #tpu.memory_space<vmem>>, %arg3: memref<64x48xbf16, #tpu.memory_space<vmem>>, %arg4: memref<64x1xf32, #tpu.memory_space<vmem>>, %arg5: memref<64x64xbf16, #tpu.memory_space<vmem>>, %arg6: memref<64x1xf32, #tpu.memory_space<vmem>>, %arg7: memref<3x64xbf16, #tpu.memory_space<vmem>>, %arg8: memref<3x1xf32, #tpu.memory_space<vmem>>, %arg9: memref<1x3x128xf32, #tpu.memory_space<vmem>>) attributes {dimension_semantics = [#tpu.dimension_semantics<parallel>, #tpu.dimension_semantics<parallel>], iteration_bounds = array<i64: 2, 1>, scalar_prefetch = 0 : i64, scratch_operands = 0 : i64, tpu.core_type = #tpu.core_type<tc>, window_params = [{transform_indices = @transform_0, window_bounds = array<i64: 1, 48, 128>}, {pipeline_mode = #tpu.pipeline_mode<synchronous>, transform_indices = @transform_1, window_bounds = array<i64: 64, 48>}, {pipeline_mode = #tpu.pipeline_mode<synchronous>, transform_indices = @transform_2, window_bounds = array<i64: 64, 1>}, {pipeline_mode = #tpu.pipeline_mode<synchronous>, transform_indices = @transform_3, window_bounds = array<i64: 64, 64>}, {pipeline_mode = #tpu.pipeline_mode<synchronous>, transform_indices = @transform_4, window_bounds = array<i64: 64, 1>}, {pipeline_mode = #tpu.pipeline_mode<synchronous>, transform_indices = @transform_5, window_bounds = array<i64: 3, 64>}, {pipeline_mode = #tpu.pipeline_mode<synchronous>, transform_indices = @transform_6, window_bounds = array<i64: 3, 1>}, {transform_indices = @transform_7, window_bounds = array<i64: 1, 3, 128>}]} {
    %c0 = arith.constant 0 : index
    %c0_0 = arith.constant 0 : index
    %c0_1 = arith.constant 0 : index
    %0 = vector.load %arg2[%c0, %c0_0, %c0_1] : memref<1x48x128xf32, #tpu.memory_space<vmem>>, vector<1x48x128xf32>
    %1 = vector.shape_cast %0 : vector<1x48x128xf32> to vector<48x128xf32>
    %2 = arith.truncf %1 : vector<48x128xf32> to vector<48x128xbf16>
    %c0_2 = arith.constant 0 : index
    %c0_3 = arith.constant 0 : index
    %3 = vector.load %arg3[%c0_2, %c0_3] : memref<64x48xbf16, #tpu.memory_space<vmem>>, vector<64x48xbf16>
    %cst = arith.constant dense<0.000000e+00> : vector<64x128xf32>
    %4 = tpu.matmul %3, %2, %cst {dimension_numbers = #tpu.dot_dimension_numbers<[1], [0], [0], [1], [0, 0, 1, 1], [], []>} : vector<64x48xbf16>, vector<48x128xbf16>, vector<64x128xf32> -> vector<64x128xf32>
    %c0_4 = arith.constant 0 : index
    %c0_5 = arith.constant 0 : index
    %5 = vector.load %arg4[%c0_4, %c0_5] : memref<64x1xf32, #tpu.memory_space<vmem>>, vector<64x1xf32>
    %6 = vector.broadcast %5 : vector<64x1xf32> to vector<64x128xf32>
    %7 = arith.addf %4, %6 : vector<64x128xf32>
    %cst_6 = arith.constant 0.000000e+00 : f32
    %8 = vector.broadcast %cst_6 : f32 to vector<64x128xf32>
    %9 = arith.maximumf %7, %8 : vector<64x128xf32>
    %10 = arith.truncf %9 : vector<64x128xf32> to vector<64x128xbf16>
    %c0_7 = arith.constant 0 : index
    %c0_8 = arith.constant 0 : index
    %11 = vector.load %arg5[%c0_7, %c0_8] : memref<64x64xbf16, #tpu.memory_space<vmem>>, vector<64x64xbf16>
    %cst_9 = arith.constant dense<0.000000e+00> : vector<64x128xf32>
    %12 = tpu.matmul %11, %10, %cst_9 {dimension_numbers = #tpu.dot_dimension_numbers<[1], [0], [0], [1], [0, 0, 1, 1], [], []>} : vector<64x64xbf16>, vector<64x128xbf16>, vector<64x128xf32> -> vector<64x128xf32>
    %c0_10 = arith.constant 0 : index
    %c0_11 = arith.constant 0 : index
    %13 = vector.load %arg6[%c0_10, %c0_11] : memref<64x1xf32, #tpu.memory_space<vmem>>, vector<64x1xf32>
    %14 = vector.broadcast %13 : vector<64x1xf32> to vector<64x128xf32>
    %15 = arith.addf %12, %14 : vector<64x128xf32>
    %cst_12 = arith.constant 0.000000e+00 : f32
    %16 = vector.broadcast %cst_12 : f32 to vector<64x128xf32>
    %17 = arith.maximumf %15, %16 : vector<64x128xf32>
    %18 = arith.truncf %17 : vector<64x128xf32> to vector<64x128xbf16>
    %c0_13 = arith.constant 0 : index
    %c0_14 = arith.constant 0 : index
    %19 = vector.load %arg7[%c0_13, %c0_14] : memref<3x64xbf16, #tpu.memory_space<vmem>>, vector<3x64xbf16>
    %cst_15 = arith.constant dense<0.000000e+00> : vector<3x128xf32>
    %20 = tpu.matmul %19, %18, %cst_15 {dimension_numbers = #tpu.dot_dimension_numbers<[1], [0], [0], [1], [0, 0, 1, 1], [], []>} : vector<3x64xbf16>, vector<64x128xbf16>, vector<3x128xf32> -> vector<3x128xf32>
    %c0_16 = arith.constant 0 : index
    %c0_17 = arith.constant 0 : index
    %21 = vector.load %arg8[%c0_16, %c0_17] : memref<3x1xf32, #tpu.memory_space<vmem>>, vector<3x1xf32>
    %22 = vector.broadcast %21 : vector<3x1xf32> to vector<3x128xf32>
    %23 = arith.addf %20, %22 : vector<3x128xf32>
    %c0_18 = arith.constant 0 : index
    %c0_19 = arith.constant 0 : index
    %c0_20 = arith.constant 0 : index
    %24 = vector.load %arg9[%c0_18, %c0_19, %c0_20] : memref<1x3x128xf32, #tpu.memory_space<vmem>>, vector<1x3x128xf32>
    %25 = vector.shape_cast %24 : vector<1x3x128xf32> to vector<3x128xf32>
    %26 = vector.shape_cast %23 : vector<3x128xf32> to vector<1x3x128xf32>
    tpu.vector_store %arg9[%c0_18, %c0_19, %c0_20], %26 {strides = array<i32>} : memref<1x3x128xf32, #tpu.memory_space<vmem>>, vector<1x3x128xf32>,
    return
  }
  func.func @transform_0(%arg0: i32, %arg1: i32) -> (i32, i32, i32) {
    %c0_i32 = arith.constant 0 : i32
    %c0_i32_0 = arith.constant 0 : i32
    return %arg0, %c0_i32, %arg1 : i32, i32, i32
  }
  func.func @transform_1(%arg0: i32, %arg1: i32) -> (i32, i32) {
    %c0_i32 = arith.constant 0 : i32
    %c0_i32_0 = arith.constant 0 : i32
    %c0_i32_1 = arith.constant 0 : i32
    return %c0_i32, %c0_i32_0 : i32, i32
  }
  func.func @transform_2(%arg0: i32, %arg1: i32) -> (i32, i32) {
    %c0_i32 = arith.constant 0 : i32
    %c0_i32_0 = arith.constant 0 : i32
    %c0_i32_1 = arith.constant 0 : i32
    return %c0_i32, %c0_i32_0 : i32, i32
  }
  func.func @transform_3(%arg0: i32, %arg1: i32) -> (i32, i32) {
    %c0_i32 = arith.constant 0 : i32
    %c0_i32_0 = arith.constant 0 : i32
    %c0_i32_1 = arith.constant 0 : i32
    return %c0_i32, %c0_i32_0 : i32, i32
  }
  func.func @transform_4(%arg0: i32, %arg1: i32) -> (i32, i32) {
    %c0_i32 = arith.constant 0 : i32
    %c0_i32_0 = arith.constant 0 : i32
    %c0_i32_1 = arith.constant 0 : i32
    return %c0_i32, %c0_i32_0 : i32, i32
  }
  func.func @transform_5(%arg0: i32, %arg1: i32) -> (i32, i32) {
    %c0_i32 = arith.constant 0 : i32
    %c0_i32_0 = arith.constant 0 : i32
    %c0_i32_1 = arith.constant 0 : i32
    return %c0_i32, %c0_i32_0 : i32, i32
  }
  func.func @transform_6(%arg0: i32, %arg1: i32) -> (i32, i32) {
    %c0_i32 = arith.constant 0 : i32
    %c0_i32_0 = arith.constant 0 : i32
    %c0_i32_1 = arith.constant 0 : i32
    return %c0_i32, %c0_i32_0 : i32, i32
  }
  func.func @transform_7(%arg0: i32, %arg1: i32) -> (i32, i32, i32) {
    %c0_i32 = arith.constant 0 : i32
    %c0_i32_0 = arith.constant 0 : i32
    return %arg0, %c0_i32, %arg1 : i32, i32, i32
  }
}

</mosaic_0001>

<llo_original>
// kernel: larmatch_kpshift_forward.1
$region0: #{larmatch_kpshift_forward.1}
  #allocation0 [shape = 'u32[]', space=smem, size = 0x4, offset = 0x4, fixed_abs, tag = 'smem constant byte address 0x4 - core index']
  #allocation1 [shape = 'u32[144,128]{1,0:T(1,128)}', space=vmem, size = 0x12000, scoped, tag = 'internal scratch']
  %s0 = inlined_call_operand.vmem [shape: f32[2,48,16], index: 0, kind: input, shape index: {}]
  %s1 = inlined_call_operand.vmem [shape: bf16[64,48], index: 1, kind: input, shape index: {}]
  %s2 = inlined_call_operand.vmem [shape: f32[64,1], index: 2, kind: input, shape index: {}]
  %s3 = inlined_call_operand.vmem [shape: bf16[64,64], index: 3, kind: input, shape index: {}]
  %s4 = inlined_call_operand.vmem [shape: f32[64,1], index: 4, kind: input, shape index: {}]
  %s5 = inlined_call_operand.vmem [shape: bf16[3,64], index: 5, kind: input, shape index: {}]
  %s6 = inlined_call_operand.vmem [shape: f32[3,1], index: 6, kind: input, shape index: {}]
  %s7 = inlined_call_operand.vmem [shape: f32[2,3,16], index: 7, kind: output, shape index: {}]
  %s8 = sld [smem:[#allocation0]]
  $region61: #{larmatch_kpshift_forward.1} parent=0
    _
  %s10 = ssub.s32 1, %s8
  %s11 = scalar_select 0, %s10, %s8
  loop: start=0, step=1, limit=4
  $region2: #{larmatch_kpshift_forward.1} parent=0 // loop_pre_header
    _
  $region3: #{larmatch_kpshift_forward.1} parent=0 // loop_header
    %s13 = sphi 0, %s17
    %p14 = scmp.ge.s32.totalorder %s13, 4
    %s20 = sphi 0, %s32
    %s21 = sphi 0, %s28
    %s22 = sphi 0, %s20
    %s23 = sphi 0, %s21
    %s24 = sphi 0, %s22
    %s25 = sphi 0, %s23
    %s37 = sphi 0, %s39
    %s40 = sphi 0, %s37
    %s41 = sphi 0, %s40
    %s57 = sphi 0, %s41
    %s61 = sphi 0, %s61
    %s63 = sphi 0, %s61
    %s64 = sphi 0, %s63
    %s78 = sphi 0, %s64
    %s82 = sphi 0, %s82
    %s84 = sphi 0, %s82
    %s85 = sphi 0, %s84
    %s99 = sphi 0, %s85
    %s103 = sphi 0, %s103
    %s105 = sphi 0, %s103
    %s106 = sphi 0, %s105
    %s120 = sphi 0, %s106
    %s124 = sphi 0, %s124
    %s126 = sphi 0, %s124
    %s127 = sphi 0, %s126
    %s141 = sphi 0, %s127
    %s145 = sphi 0, %s145
    %s147 = sphi 0, %s145
    %s148 = sphi 0, %s147
    %s162 = sphi 0, %s148
    %s166 = sphi 0, %s166
    %s168 = sphi 0, %s166
    %s169 = sphi 0, %s168
    %s183 = sphi 0, %s169
    %s191 = sphi 0, %s193
    %s194 = sphi 0, %s191
    %s195 = sphi 0, %s194
    %s211 = sphi 0, %s195
  $region4: #{larmatch_kpshift_forward.1} parent=0 // loop_header_branch
    %16 = sbr.rel (%p14) target = $region8
  $region5: #{larmatch_kpshift_forward.1} parent=0 // loop_body
    %s18 = ssub.s32 %s13, 1
    %s19 = ssub.s32 %s13, 2
    %s26 = sadd.s32 1, %s21
    %p27 = scmp.ge.s32.totalorder %s26, 1
    %s28 = scalar_select %p27, 0, %s26
    %s29 = sadd.s32 1, %s20
    %s30 = scalar_select %p27, %s29, %s20
    %p31 = scmp.ge.s32.totalorder %s30, 2
    %s32 = scalar_select %p31, 0, %s30
    %s33 = ssub.s32 %s20, %s32
    %s34 = ssub.s32 %s21, %s28
    %s35 = sor.u32 %s33, %s34
    %p36 = scmp.eq.s32.totalorder %s35, 0
    %s38 = sadd.s32 %s37, 1
    %s39 = scalar_select %p36, %s37, %s38
    %p42 = pneg %p36
    %p43 = scmp.eq.s32.totalorder %s13, 1
    %p44 = por %p42, %p43
    %p45 = scmp.ne.s32.totalorder %s37, %s40
    %p46 = scmp.eq.s32.totalorder %s13, 0
    %p47 = por %p45, %p46
    %p48 = scmp.ne.s32.totalorder %s37, %s40
    %p49 = scmp.eq.s32.totalorder %s18, 1
    %p50 = por %p48, %p49
    %p51 = scmp.ne.s32.totalorder %s40, %s41
    %p52 = scmp.eq.s32.totalorder %s18, 0
    %p53 = por %p51, %p52
    %p54 = scmp.ne.s32.totalorder %s40, %s41
    %p55 = scmp.eq.s32.totalorder %s19, 1
    %p56 = por %p54, %p55
    %p58 = scmp.ne.s32.totalorder %s41, %s57
    %p59 = scmp.eq.s32.totalorder %s19, 0
    %p60 = por %p58, %p59
    %s62 = sadd.s32 %s61, 1
    %p65 = scmp.eq.s32.totalorder %s13, 1
    %p66 = scmp.ne.s32.totalorder %s61, %s63
    %p67 = scmp.eq.s32.totalorder %s13, 0
    %p68 = por %p66, %p67
    %p69 = scmp.ne.s32.totalorder %s61, %s63
    %p70 = scmp.eq.s32.totalorder %s18, 1
    %p71 = por %p69, %p70
    %p72 = scmp.ne.s32.totalorder %s63, %s64
    %p73 = scmp.eq.s32.totalorder %s18, 0
    %p74 = por %p72, %p73
    %p75 = scmp.ne.s32.totalorder %s63, %s64
    %p76 = scmp.eq.s32.totalorder %s19, 1
    %p77 = por %p75, %p76
    %p79 = scmp.ne.s32.totalorder %s64, %s78
    %p80 = scmp.eq.s32.totalorder %s19, 0
    %p81 = por %p79, %p80
    %s83 = sadd.s32 %s82, 1
    %p86 = scmp.eq.s32.totalorder %s13, 1
    %p87 = scmp.ne.s32.totalorder %s82, %s84
    %p88 = scmp.eq.s32.totalorder %s13, 0
    %p89 = por %p87, %p88
    %p90 = scmp.ne.s32.totalorder %s82, %s84
    %p91 = scmp.eq.s32.totalorder %s18, 1
    %p92 = por %p90, %p91
    %p93 = scmp.ne.s32.totalorder %s84, %s85
    %p94 = scmp.eq.s32.totalorder %s18, 0
    %p95 = por %p93, %p94
    %p96 = scmp.ne.s32.totalorder %s84, %s85
    %p97 = scmp.eq.s32.totalorder %s19, 1
    %p98 = por %p96, %p97
    %p100 = scmp.ne.s32.totalorder %s85, %s99
    %p101 = scmp.eq.s32.totalorder %s19, 0
    %p102 = por %p100, %p101
    %s104 = sadd.s32 %s103, 1
    %p107 = scmp.eq.s32.totalorder %s13, 1
    %p108 = scmp.ne.s32.totalorder %s103, %s105
    %p109 = scmp.eq.s32.totalorder %s13, 0
    %p110 = por %p108, %p109
    %p111 = scmp.ne.s32.totalorder %s103, %s105
    %p112 = scmp.eq.s32.totalorder %s18, 1
    %p113 = por %p111, %p112
    %p114 = scmp.ne.s32.totalorder %s105, %s106
    %p115 = scmp.eq.s32.totalorder %s18, 0
    %p116 = por %p114, %p115
    %p117 = scmp.ne.s32.totalorder %s105, %s106
    %p118 = scmp.eq.s32.totalorder %s19, 1
    %p119 = por %p117, %p118
    %p121 = scmp.ne.s32.totalorder %s106, %s120
    %p122 = scmp.eq.s32.totalorder %s19, 0
    %p123 = por %p121, %p122
    %s125 = sadd.s32 %s124, 1
    %p128 = scmp.eq.s32.totalorder %s13, 1
    %p129 = scmp.ne.s32.totalorder %s124, %s126
    %p130 = scmp.eq.s32.totalorder %s13, 0
    %p131 = por %p129, %p130
    %p132 = scmp.ne.s32.totalorder %s124, %s126
    %p133 = scmp.eq.s32.totalorder %s18, 1
    %p134 = por %p132, %p133
    %p135 = scmp.ne.s32.totalorder %s126, %s127
    %p136 = scmp.eq.s32.totalorder %s18, 0
    %p137 = por %p135, %p136
    %p138 = scmp.ne.s32.totalorder %s126, %s127
    %p139 = scmp.eq.s32.totalorder %s19, 1
    %p140 = por %p138, %p139
    %p142 = scmp.ne.s32.totalorder %s127, %s141
    %p143 = scmp.eq.s32.totalorder %s19, 0
    %p144 = por %p142, %p143
    %s146 = sadd.s32 %s145, 1
    %p149 = scmp.eq.s32.totalorder %s13, 1
    %p150 = scmp.ne.s32.totalorder %s145, %s147
    %p151 = scmp.eq.s32.totalorder %s13, 0
    %p152 = por %p150, %p151
    %p153 = scmp.ne.s32.totalorder %s145, %s147
    %p154 = scmp.eq.s32.totalorder %s18, 1
    %p155 = por %p153, %p154
    %p156 = scmp.ne.s32.totalorder %s147, %s148
    %p157 = scmp.eq.s32.totalorder %s18, 0
    %p158 = por %p156, %p157
    %p159 = scmp.ne.s32.totalorder %s147, %s148
    %p160 = scmp.eq.s32.totalorder %s19, 1
    %p161 = por %p159, %p160
    %p163 = scmp.ne.s32.totalorder %s148, %s162
    %p164 = scmp.eq.s32.totalorder %s19, 0
    %p165 = por %p163, %p164
    %s167 = sadd.s32 %s166, 1
    %p170 = scmp.eq.s32.totalorder %s13, 1
    %p171 = scmp.ne.s32.totalorder %s166, %s168
    %p172 = scmp.eq.s32.totalorder %s13, 0
    %p173 = por %p171, %p172
    %p174 = scmp.ne.s32.totalorder %s166, %s168
    %p175 = scmp.eq.s32.totalorder %s18, 1
    %p176 = por %p174, %p175
    %p177 = scmp.ne.s32.totalorder %s168, %s169
    %p178 = scmp.eq.s32.totalorder %s18, 0
    %p179 = por %p177, %p178
    %p180 = scmp.ne.s32.totalorder %s168, %s169
    %p181 = scmp.eq.s32.totalorder %s19, 1
    %p182 = por %p180, %p181
    %p184 = scmp.ne.s32.totalorder %s169, %s183
    %p185 = scmp.eq.s32.totalorder %s19, 0
    %p186 = por %p184, %p185
    %s187 = ssub.s32 %s20, %s32
    %s188 = ssub.s32 %s21, %s28
    %s189 = sor.u32 %s187, %s188
    %p190 = scmp.eq.s32.totalorder %s189, 0
    %s192 = sadd.s32 %s191, 1
    %s193 = scalar_select %p190, %s191, %s192
    %p196 = pneg %p190
    %p197 = scmp.eq.s32.totalorder %s13, 1
    %p198 = por %p196, %p197
    %p199 = scmp.ne.s32.totalorder %s191, %s194
    %p200 = scmp.eq.s32.totalorder %s13, 0
    %p201 = por %p199, %p200
    %p202 = scmp.ne.s32.totalorder %s191, %s194
    %p203 = scmp.eq.s32.totalorder %s18, 1
    %p204 = por %p202, %p203
    %p205 = scmp.ne.s32.totalorder %s194, %s195
    %p206 = scmp.eq.s32.totalorder %s18, 0
    %p207 = por %p205, %p206
    %p208 = scmp.ne.s32.totalorder %s194, %s195
    %p209 = scmp.eq.s32.totalorder %s19, 1
    %p210 = por %p208, %p209
    %p212 = scmp.ne.s32.totalorder %s195, %s211
    %p213 = scmp.eq.s32.totalorder %s19, 0
    %p214 = por %p212, %p213
    %p215 = scmp.le.s32.totalorder 1, %s13
    %p216 = scmp.lt.s32.totalorder %s13, 3
    %p217 = pnand %p215, %p216
    %p218 = pneg %p217
    // Predicated region
    $region9: #{larmatch_kpshift_forward.1} parent=5 // pred_check
      _
    $region10: #{larmatch_kpshift_forward.1} parent=5 // pred_check_branch
      %220 = sbr.rel (%p217) target = $region12
    $region11: #{larmatch_kpshift_forward.1} parent=5 // pred_region
      %s221 = ssub.s32 %s13, 1
      // Predicated region
      $region13: #{larmatch_kpshift_forward.1} parent=11 // pred_check
        %p222 = pneg %p74
      $region14: #{larmatch_kpshift_forward.1} parent=11 // pred_check_branch
        %224 = sbr.rel (%p222) target = $region16
      $region15: #{larmatch_kpshift_forward.1} parent=11 // pred_region
        _
      $region16: #{larmatch_kpshift_forward.1} parent=11 // pred_fallthru
        _
      // Predicated region
      $region17: #{larmatch_kpshift_forward.1} parent=11 // pred_check
        %p225 = pneg %p95
      $region18: #{larmatch_kpshift_forward.1} parent=11 // pred_check_branch
        %227 = sbr.rel (%p225) target = $region20
      $region19: #{larmatch_kpshift_forward.1} parent=11 // pred_region
        _
      $region20: #{larmatch_kpshift_forward.1} parent=11 // pred_fallthru
        _
      // Predicated region
      $region21: #{larmatch_kpshift_forward.1} parent=11 // pred_check
        %p228 = pneg %p116
      $region22: #{larmatch_kpshift_forward.1} parent=11 // pred_check_branch
        %230 = sbr.rel (%p228) target = $region24
      $region23: #{larmatch_kpshift_forward.1} parent=11 // pred_region
        _
      $region24: #{larmatch_kpshift_forward.1} parent=11 // pred_fallthru
        _
      // Predicated region
      $region25: #{larmatch_kpshift_forward.1} parent=11 // pred_check
        %p231 = pneg %p137
      $region26: #{larmatch_kpshift_forward.1} parent=11 // pred_check_branch
        %233 = sbr.rel (%p231) target = $region28
      $region27: #{larmatch_kpshift_forward.1} parent=11 // pred_region
        _
      $region28: #{larmatch_kpshift_forward.1} parent=11 // pred_fallthru
        _
      // Predicated region
      $region29: #{larmatch_kpshift_forward.1} parent=11 // pred_check
        %p234 = pneg %p158
      $region30: #{larmatch_kpshift_forward.1} parent=11 // pred_check_branch
        %236 = sbr.rel (%p234) target = $region32
      $region31: #{larmatch_kpshift_forward.1} parent=11 // pred_region
        _
      $region32: #{larmatch_kpshift_forward.1} parent=11 // pred_fallthru
        _
      // Predicated region
      $region33: #{larmatch_kpshift_forward.1} parent=11 // pred_check
        %p237 = pneg %p179
      $region34: #{larmatch_kpshift_forward.1} parent=11 // pred_check_branch
        %239 = sbr.rel (%p237) target = $region36
      $region35: #{larmatch_kpshift_forward.1} parent=11 // pred_region
        _
      $region36: #{larmatch_kpshift_forward.1} parent=11 // pred_fallthru
        _
    $region12: #{larmatch_kpshift_forward.1} parent=5 // pred_fallthru
      _
    %p240 = scmp.lt.s32.totalorder %s13, 2
    // Predicated region
    $region37: #{larmatch_kpshift_forward.1} parent=5 // pred_check
      %p241 = pneg %p240
    $region38: #{larmatch_kpshift_forward.1} parent=5 // pred_check_branch
      %243 = sbr.rel (%p241) target = $region40
    $region39: #{larmatch_kpshift_forward.1} parent=5 // pred_region
      // Predicated region
      $region41: #{larmatch_kpshift_forward.1} parent=39 // pred_check
        %p244 = pneg %p47
      $region42: #{larmatch_kpshift_forward.1} parent=39 // pred_check_branch
        %246 = sbr.rel (%p244) target = $region44
      $region43: #{larmatch_kpshift_forward.1} parent=39 // pred_region
        %p247 = scmp.lt.s32.totalorder %s20, 1
        %s248 = scalar_select %p247, %s20, 1
        %p249 = scmp.lt.s32.totalorder %s21, 0
        %s250 = scalar_select %p249, %s21, 0
        %s251 = smul.addr %s248, 6
        %s252 = sadd.s32 %s250, %s251
        %s253 = smul.addr %s252, 8
        %s254 = scalar_lea.vmem %s0, %s253
      $region44: #{larmatch_kpshift_forward.1} parent=39 // pred_fallthru
        _
    $region40: #{larmatch_kpshift_forward.1} parent=5 // pred_fallthru
      _
    %p255 = scmp.le.s32.totalorder 1, %s13
    %p256 = scmp.lt.s32.totalorder %s13, 3
    %p257 = pnand %p255, %p256
    %p258 = pneg %p257
    // Predicated region
    $region45: #{larmatch_kpshift_forward.1} parent=5 // pred_check
      _
    $region46: #{larmatch_kpshift_forward.1} parent=5 // pred_check_branch
      %260 = sbr.rel (%p257) target = $region48
    $region47: #{larmatch_kpshift_forward.1} parent=5 // pred_region
      %s261 = ssub.s32 %s13, 1
      %p262 = scmp.lt.s32.totalorder %s22, 1
      %s263 = scalar_select %p262, %s22, 1
      %p264 = scmp.lt.s32.totalorder %s23, 0
      %s265 = scalar_select %p264, %s23, 0
      %s266 = smul.addr %s263, 6
      %s267 = sadd.s32 %s265, %s266
      %s268 = smul.addr %s267, 8
      %s269 = scalar_lea.vmem %s0, %s268
      %p270 = pneg %p53
      %p271 = pneg %p50
      %p272 = pneg %p74
      %p273 = pneg %p71
      %p274 = pneg %p95
      %p275 = pneg %p92
      %p276 = pneg %p116
      %p277 = pneg %p113
      %p278 = pneg %p137
      %p279 = pneg %p134
      %p280 = pneg %p158
      %p281 = pneg %p155
      %p282 = pneg %p179
      %p283 = pneg %p176
      %p284 = pneg %p207
      %p285 = pneg %p204
      %p286 = scmp.lt.s32.totalorder %s22, 1
      %s287 = scalar_select %p286, %s22, 1
      %p288 = scmp.lt.s32.totalorder %s23, 0
      %s289 = scalar_select %p288, %s23, 0
      %s290 = sadd.s32 %s289, %s287
      %s291 = smul.addr %s290, 4
      %s292 = scalar_lea.vmem %s7, %s291
      %p293 = scmp.lt.s32.totalorder %s22, 1
      %s294 = scalar_select %p293, %s22, 1
      %p295 = scmp.lt.s32.totalorder %s23, 0
      %s296 = scalar_select %p295, %s23, 0
      %s297 = smul.addr %s294, 6
      %s298 = sadd.s32 %s296, %s297
      %s299 = smul.addr %s298, 8
      %s300 = scalar_lea.vmem %s0, %s299
      %p301 = scmp.lt.s32.totalorder %s22, 1
      %s302 = scalar_select %p301, %s22, 1
      %p303 = scmp.lt.s32.totalorder %s23, 0
      %s304 = scalar_select %p303, %s23, 0
      %s305 = sadd.s32 %s304, %s302
      %s306 = smul.addr %s305, 4
      %s307 = scalar_lea.vmem %s7, %s306
      %v309 = vld [vmem:[%s300] sm:$0xff]
      %v310 = vld [vmem:[%s300 + $0x8] sm:$0xff]
      %v311 = vld [vmem:[%s300 + $0x10] sm:$0xff]
      %v312 = vld [vmem:[%s300 + $0x18] sm:$0xff]
      %v313 = vld [vmem:[%s300 + $0x20] sm:$0xff]
      %v314 = vld [vmem:[%s300 + $0x28] sm:$0xff]
      %v315 = vpack.c.bf16 %v310, %v309
      %v316 = vpack.c.bf16 %v312, %v311
      %v317 = vpack.c.bf16 %v314, %v313
      %v318 = vld [vmem:[%s1] sm:$0xf]
      %v319 = vld [vmem:[%s1 + $0x4] sm:$0xf]
      %v320 = vld [vmem:[%s1 + $0x8] sm:$0xf]
      %v321 = vld [vmem:[%s1 + $0xc] sm:$0xf]
      %v322 = vld [vmem:[%s1 + $0x10] sm:$0xf]
      %v323 = vld [vmem:[%s1 + $0x14] sm:$0xf]
      %v324 = vld [vmem:[%s1 + $0x18] sm:$0xf]
      %v325 = vld [vmem:[%s1 + $0x1c] sm:$0xf]
      %v326 = vld [vmem:[%s2] sm:$0xff]
      %v327 = vld [vmem:[%s2 + $0x8] sm:$0xff]
      %v328 = vld [vmem:[%s2 + $0x10] sm:$0xff]
      %v329 = vld [vmem:[%s2 + $0x18] sm:$0xff]
      %v330 = vld [vmem:[%s2 + $0x20] sm:$0xff]
      %v331 = vld [vmem:[%s2 + $0x28] sm:$0xff]
      %v332 = vld [vmem:[%s2 + $0x30] sm:$0xff]
      %v333 = vld [vmem:[%s2 + $0x38] sm:$0xff]
      %335 = vset.pattern.permute.xlu0 0
      %336 = vperm.xlu0 %335, %v326
      %v337 = vpop.permute.xlu0 %336
      %340 = vset.pattern.permute.xlu0 0
      %341 = vperm.xlu0 %340, %v327
      %v342 = vpop.permute.xlu0 %341
      %345 = vset.pattern.permute.xlu0 0
      %346 = vperm.xlu0 %345, %v328
      %v347 = vpop.permute.xlu0 %346
      %350 = vset.pattern.permute.xlu0 0
      %351 = vperm.xlu0 %350, %v329
      %v352 = vpop.permute.xlu0 %351
      %355 = vset.pattern.permute.xlu0 0
      %356 = vperm.xlu0 %355, %v330
      %v357 = vpop.permute.xlu0 %356
      %360 = vset.pattern.permute.xlu0 0
      %361 = vperm.xlu0 %360, %v331
      %v362 = vpop.permute.xlu0 %361
      %365 = vset.pattern.permute.xlu0 0
      %366 = vperm.xlu0 %365, %v332
      %v367 = vpop.permute.xlu0 %366
      %370 = vset.pattern.permute.xlu0 0
      %371 = vperm.xlu0 %370, %v333
      %v372 = vpop.permute.xlu0 %371
      %v382 = vunpack.c.l.b16 %v318
      %v383 = vunpack.c.l.b16 %v319
      %v384 = vunpack.c.l.b16 %v320
      %v385 = vunpack.c.l.b16 %v321
      %v386 = vunpack.c.l.b16 %v322
      %v387 = vunpack.c.l.b16 %v323
      %v388 = vunpack.c.l.b16 %v324
      %v389 = vunpack.c.l.b16 %v325
      %v390 = vpack.c.b16 %v383, %v382
      %v391 = vpack.c.b16 %v385, %v384
      %v392 = vpack.c.b16 %v387, %v386
      %v393 = vpack.c.b16 %v389, %v388
      %vm394 = vcmask 392192
      %v396 = vsel %vm394, %v390, 0
      %v399 = vsel %vm394, %v391, 0
      %v402 = vsel %vm394, %v392, 0
      %v405 = vsel %vm394, %v393, 0
      %407 = vmatprep.subr.bf16.mxu0 0
      %408 = vmatpush1.bf16.msra.mxu0 %v315
      %409 = vmatprep.subr.bf16.mxu0 0
      %410 = vmatpush1.bf16.msra.mxu0 %v316
      %411 = vmatprep.subr.bf16.mxu0 0
      %412 = vmatpush1.bf16.msra.mxu0 %v317
      %413 = vmatprep.subr.bf16.mxu0 0
      %414 = vmatpush1.bf16.msra.mxu0 0
      %415 = vmatprep.subr.bf16.mxu0 0
      %416 = vmatpush1.bf16.msra.mxu0 0
      %417 = vmatprep.subr.bf16.mxu0 0
      %418 = vmatpush1.bf16.msra.mxu0 0
      %419 = vmatprep.subr.bf16.mxu0 0
      %420 = vmatpush1.bf16.msra.mxu0 0
      %421 = vmatprep.subr.bf16.mxu0 0
      %422 = vmatpush1.bf16.msra.mxu0 0
      %423 = vmatprep.subr.bf16.mxu0 0
      %424 = vmatpush1.bf16.msra.mxu0 0
      %425 = vmatprep.subr.bf16.mxu0 0
      %426 = vmatpush1.bf16.msra.mxu0 0
      %427 = vmatprep.subr.bf16.mxu0 0
      %428 = vmatpush1.bf16.msra.mxu0 0
      %429 = vmatprep.subr.bf16.mxu0 0
      %430 = vmatpush1.bf16.msra.mxu0 0
      %431 = vmatprep.subr.bf16.mxu0 0
      %432 = vmatpush1.bf16.msra.mxu0 0
      %433 = vmatprep.subr.bf16.mxu0 0
      %434 = vmatpush1.bf16.msra.mxu0 0
      %435 = vmatprep.subr.bf16.mxu0 0
      %436 = vmatpush1.bf16.msra.mxu0 0
      %437 = vmatprep.subr.bf16.mxu0 0
      %438 = vmatpush1.bf16.msra.mxu0 0
      %439 = vmatprep.mubr.bf16.mxu0 0
      %440 = vmatmul.mubr.bf16.gmra.mrb[0].mxu0 %v396
      %v441 = vpop.f32.mrb[0].mxu0
      %v442 = vadd.f32 %v337, %v441
      %v443 = vpop.f32.mrb[0].mxu0
      %v444 = vpop.f32.mrb[0].mxu0
      %v445 = vadd.f32 %v342, %v444
      %v446 = vpop.f32.mrb[0].mxu0
      %447 = vmatprep.mubr.bf16.mxu0 0
      %448 = vmatmul.mubr.bf16.gmra.mrb[0].mxu0 %v399
      %v449 = vpop.f32.mrb[0].mxu0
      %v450 = vadd.f32 %v347, %v449
      %v451 = vpop.f32.mrb[0].mxu0
      %v452 = vpop.f32.mrb[0].mxu0
      %v453 = vadd.f32 %v352, %v452
      %v454 = vpop.f32.mrb[0].mxu0
      %455 = vmatprep.mubr.bf16.mxu0 0
      %456 = vmatmul.mubr.bf16.gmra.mrb[0].mxu0 %v402
      %v457 = vpop.f32.mrb[0].mxu0
      %v458 = vadd.f32 %v357, %v457
      %v459 = vpop.f32.mrb[0].mxu0
      %v460 = vpop.f32.mrb[0].mxu0
      %v461 = vadd.f32 %v362, %v460
      %v462 = vpop.f32.mrb[0].mxu0
      %463 = vmatprep.mubr.bf16.mxu0 0
      %464 = vmatmul.mubr.bf16.gmra.mrb[0].mxu0 %v405
      %v465 = vpop.f32.mrb[0].mxu0
      %v466 = vadd.f32 %v367, %v465
      %v467 = vpop.f32.mrb[0].mxu0
      %v468 = vpop.f32.mrb[0].mxu0
      %v469 = vadd.f32 %v372, %v468
      %v470 = vpop.f32.mrb[0].mxu0
      %471 = vdwg.mxu0
      %v472 = vmax.f32 %v442, 0.0
      %v473 = vmax.f32 %v445, 0.0
      %v474 = vmax.f32 %v450, 0.0
      %v475 = vmax.f32 %v453, 0.0
      %v476 = vmax.f32 %v458, 0.0
      %v477 = vmax.f32 %v461, 0.0
      %v478 = vmax.f32 %v466, 0.0
      %v479 = vmax.f32 %v469, 0.0
      %v480 = vpack.c.bf16 %v473, %v472
      %v481 = vpack.c.bf16 %v475, %v474
      %v482 = vpack.c.bf16 %v477, %v476
      %v483 = vpack.c.bf16 %v479, %v478
      %v484 = vld [vmem:[%s3] sm:$0xf]
      %v485 = vld [vmem:[%s3 + $0x4] sm:$0xf]
      %v486 = vld [vmem:[%s3 + $0x8] sm:$0xf]
      %v487 = vld [vmem:[%s3 + $0xc] sm:$0xf]
      %v488 = vld [vmem:[%s3 + $0x10] sm:$0xf]
      %v489 = vld [vmem:[%s3 + $0x14] sm:$0xf]
      %v490 = vld [vmem:[%s3 + $0x18] sm:$0xf]
      %v491 = vld [vmem:[%s3 + $0x1c] sm:$0xf]
      %v492 = vld [vmem:[%s4] sm:$0xff]
      %v493 = vld [vmem:[%s4 + $0x8] sm:$0xff]
      %v494 = vld [vmem:[%s4 + $0x10] sm:$0xff]
      %v495 = vld [vmem:[%s4 + $0x18] sm:$0xff]
      %v496 = vld [vmem:[%s4 + $0x20] sm:$0xff]
      %v497 = vld [vmem:[%s4 + $0x28] sm:$0xff]
      %v498 = vld [vmem:[%s4 + $0x30] sm:$0xff]
      %v499 = vld [vmem:[%s4 + $0x38] sm:$0xff]
      %501 = vset.pattern.permute.xlu0 0
      %502 = vperm.xlu0 %501, %v492
      %v503 = vpop.permute.xlu0 %502
      %506 = vset.pattern.permute.xlu0 0
      %507 = vperm.xlu0 %506, %v493
      %v508 = vpop.permute.xlu0 %507
      %511 = vset.pattern.permute.xlu0 0
      %512 = vperm.xlu0 %511, %v494
      %v513 = vpop.permute.xlu0 %512
      %516 = vset.pattern.permute.xlu0 0
      %517 = vperm.xlu0 %516, %v495
      %v518 = vpop.permute.xlu0 %517
      %521 = vset.pattern.permute.xlu0 0
      %522 = vperm.xlu0 %521, %v496
      %v523 = vpop.permute.xlu0 %522
      %526 = vset.pattern.permute.xlu0 0
      %527 = vperm.xlu0 %526, %v497
      %v528 = vpop.permute.xlu0 %527
      %531 = vset.pattern.permute.xlu0 0
      %532 = vperm.xlu0 %531, %v498
      %v533 = vpop.permute.xlu0 %532
      %536 = vset.pattern.permute.xlu0 0
      %537 = vperm.xlu0 %536, %v499
      %v538 = vpop.permute.xlu0 %537
      %v548 = vunpack.c.l.b16 %v484
      %v549 = vunpack.c.l.b16 %v485
      %v550 = vunpack.c.l.b16 %v486
      %v551 = vunpack.c.l.b16 %v487
      %v552 = vunpack.c.l.b16 %v488
      %v553 = vunpack.c.l.b16 %v489
      %v554 = vunpack.c.l.b16 %v490
      %v555 = vunpack.c.l.b16 %v491
      %v556 = vpack.c.b16 %v549, %v548
      %v557 = vpack.c.b16 %v551, %v550
      %v558 = vpack.c.b16 %v553, %v552
      %v559 = vpack.c.b16 %v555, %v554
      %vm560 = vcmask 523264
      %v562 = vsel %vm560, %v556, 0
      %v565 = vsel %vm560, %v557, 0
      %v568 = vsel %vm560, %v558, 0
      %v571 = vsel %vm560, %v559, 0
      %573 = vmatprep.subr.bf16.mxu0 0
      %574 = vmatpush1.bf16.msra.mxu0 %v480
      %575 = vmatprep.subr.bf16.mxu0 0
      %576 = vmatpush1.bf16.msra.mxu0 %v481
      %577 = vmatprep.subr.bf16.mxu0 0
      %578 = vmatpush1.bf16.msra.mxu0 %v482
      %579 = vmatprep.subr.bf16.mxu0 0
      %580 = vmatpush1.bf16.msra.mxu0 %v483
      %581 = vmatprep.subr.bf16.mxu0 0
      %582 = vmatpush1.bf16.msra.mxu0 0
      %583 = vmatprep.subr.bf16.mxu0 0
      %584 = vmatpush1.bf16.msra.mxu0 0
      %585 = vmatprep.subr.bf16.mxu0 0
      %586 = vmatpush1.bf16.msra.mxu0 0
      %587 = vmatprep.subr.bf16.mxu0 0
      %588 = vmatpush1.bf16.msra.mxu0 0
      %589 = vmatprep.subr.bf16.mxu0 0
      %590 = vmatpush1.bf16.msra.mxu0 0
      %591 = vmatprep.subr.bf16.mxu0 0
      %592 = vmatpush1.bf16.msra.mxu0 0
      %593 = vmatprep.subr.bf16.mxu0 0
      %594 = vmatpush1.bf16.msra.mxu0 0
      %595 = vmatprep.subr.bf16.mxu0 0
      %596 = vmatpush1.bf16.msra.mxu0 0
      %597 = vmatprep.subr.bf16.mxu0 0
      %598 = vmatpush1.bf16.msra.mxu0 0
      %599 = vmatprep.subr.bf16.mxu0 0
      %600 = vmatpush1.bf16.msra.mxu0 0
      %601 = vmatprep.subr.bf16.mxu0 0
      %602 = vmatpush1.bf16.msra.mxu0 0
      %603 = vmatprep.subr.bf16.mxu0 0
      %604 = vmatpush1.bf16.msra.mxu0 0
      %605 = vmatprep.mubr.bf16.mxu0 0
      %606 = vmatmul.mubr.bf16.gmra.mrb[0].mxu0 %v562
      %v607 = vpop.f32.mrb[0].mxu0
      %v608 = vadd.f32 %v503, %v607
      %v609 = vpop.f32.mrb[0].mxu0
      %v610 = vpop.f32.mrb[0].mxu0
      %v611 = vadd.f32 %v508, %v610
      %v612 = vpop.f32.mrb[0].mxu0
      %613 = vmatprep.mubr.bf16.mxu0 0
      %614 = vmatmul.mubr.bf16.gmra.mrb[0].mxu0 %v565
      %v615 = vpop.f32.mrb[0].mxu0
      %v616 = vadd.f32 %v513, %v615
      %v617 = vpop.f32.mrb[0].mxu0
      %v618 = vpop.f32.mrb[0].mxu0
      %v619 = vadd.f32 %v518, %v618
      %v620 = vpop.f32.mrb[0].mxu0
      %621 = vmatprep.mubr.bf16.mxu0 0
      %622 = vmatmul.mubr.bf16.gmra.mrb[0].mxu0 %v568
      %v623 = vpop.f32.mrb[0].mxu0
      %v624 = vadd.f32 %v523, %v623
      %v625 = vpop.f32.mrb[0].mxu0
      %v626 = vpop.f32.mrb[0].mxu0
      %v627 = vadd.f32 %v528, %v626
      %v628 = vpop.f32.mrb[0].mxu0
      %629 = vmatprep.mubr.bf16.mxu0 0
      %630 = vmatmul.mubr.bf16.gmra.mrb[0].mxu0 %v571
      %v631 = vpop.f32.mrb[0].mxu0
      %v632 = vadd.f32 %v533, %v631
      %v633 = vpop.f32.mrb[0].mxu0
      %v634 = vpop.f32.mrb[0].mxu0
      %v635 = vadd.f32 %v538, %v634
      %v636 = vpop.f32.mrb[0].mxu0
      %637 = vdwg.mxu0
      %v638 = vmax.f32 %v608, 0.0
      %v639 = vmax.f32 %v611, 0.0
      %v640 = vmax.f32 %v616, 0.0
      %v641 = vmax.f32 %v619, 0.0
      %v642 = vmax.f32 %v624, 0.0
      %v643 = vmax.f32 %v627, 0.0
      %v644 = vmax.f32 %v632, 0.0
      %v645 = vmax.f32 %v635, 0.0
      %v646 = vpack.c.bf16 %v639, %v638
      %v647 = vpack.c.bf16 %v641, %v640
      %v648 = vpack.c.bf16 %v643, %v642
      %v649 = vpack.c.bf16 %v645, %v644
      %v650 = vld [vmem:[%s5] sm:$0x3]
      %v651 = vld [vmem:[%s6] sm:$0x7]
      %653 = vset.pattern.permute.xlu0 0
      %654 = vperm.xlu0 %653, %v651
      %v655 = vpop.permute.xlu0 %654
      %v658 = vsel %vm560, %v650, 0
      %660 = vmatprep.subr.bf16.mxu0 0
      %661 = vmatpush1.bf16.msra.mxu0 %v646
      %662 = vmatprep.subr.bf16.mxu0 0
      %663 = vmatpush1.bf16.msra.mxu0 %v647
      %664 = vmatprep.subr.bf16.mxu0 0
      %665 = vmatpush1.bf16.msra.mxu0 %v648
      %666 = vmatprep.subr.bf16.mxu0 0
      %667 = vmatpush1.bf16.msra.mxu0 %v649
      %668 = vmatprep.subr.bf16.mxu0 0
      %669 = vmatpush1.bf16.msra.mxu0 0
      %670 = vmatprep.subr.bf16.mxu0 0
      %671 = vmatpush1.bf16.msra.mxu0 0
      %672 = vmatprep.subr.bf16.mxu0 0
      %673 = vmatpush1.bf16.msra.mxu0 0
      %674 = vmatprep.subr.bf16.mxu0 0
      %675 = vmatpush1.bf16.msra.mxu0 0
      %676 = vmatprep.subr.bf16.mxu0 0
      %677 = vmatpush1.bf16.msra.mxu0 0
      %678 = vmatprep.subr.bf16.mxu0 0
      %679 = vmatpush1.bf16.msra.mxu0 0
      %680 = vmatprep.subr.bf16.mxu0 0
      %681 = vmatpush1.bf16.msra.mxu0 0
      %682 = vmatprep.subr.bf16.mxu0 0
      %683 = vmatpush1.bf16.msra.mxu0 0
      %684 = vmatprep.subr.bf16.mxu0 0
      %685 = vmatpush1.bf16.msra.mxu0 0
      %686 = vmatprep.subr.bf16.mxu0 0
      %687 = vmatpush1.bf16.msra.mxu0 0
      %688 = vmatprep.subr.bf16.mxu0 0
      %689 = vmatpush1.bf16.msra.mxu0 0
      %690 = vmatprep.subr.bf16.mxu0 0
      %691 = vmatpush1.bf16.msra.mxu0 0
      %692 = vmatprep.mubr.bf16.mxu0 0
      %693 = vmatmul.mubr.bf16.gmra.mrb[0].mxu0 %v658
      %v694 = vpop.f32.mrb[0].mxu0
      %v695 = vadd.f32 %v655, %v694
      %v696 = vpop.f32.mrb[0].mxu0
      %v697 = vpop.f32.mrb[0].mxu0
      %v698 = vpop.f32.mrb[0].mxu0
      %699 = vdwg.mxu0
      %700 = vst [vmem:[%s307] sm:$0x7] %v695
      %p701 = scmp.lt.s32.totalorder %s22, 1
      %s702 = scalar_select %p701, %s22, 1
      %p703 = scmp.lt.s32.totalorder %s23, 0
      %s704 = scalar_select %p703, %s23, 0
      %s705 = sadd.s32 %s704, %s702
      %s706 = smul.addr %s705, 4
      %s707 = scalar_lea.vmem %s7, %s706
      // Predicated region
      $region49: #{larmatch_kpshift_forward.1} parent=47 // pred_check
        %p708 = pneg %p204
      $region50: #{larmatch_kpshift_forward.1} parent=47 // pred_check_branch
        %710 = sbr.rel (%p708) target = $region52
      $region51: #{larmatch_kpshift_forward.1} parent=47 // pred_region
        _
      $region52: #{larmatch_kpshift_forward.1} parent=47 // pred_fallthru
        _
    $region48: #{larmatch_kpshift_forward.1} parent=5 // pred_fallthru
      _
    %p711 = scmp.le.s32.totalorder 2, %s13
    // Predicated region
    $region53: #{larmatch_kpshift_forward.1} parent=5 // pred_check
      %p712 = pneg %p711
    $region54: #{larmatch_kpshift_forward.1} parent=5 // pred_check_branch
      %714 = sbr.rel (%p712) target = $region56
    $region55: #{larmatch_kpshift_forward.1} parent=5 // pred_region
      %s715 = ssub.s32 %s13, 2
      // Predicated region
      $region57: #{larmatch_kpshift_forward.1} parent=55 // pred_check
        %p716 = pneg %p210
      $region58: #{larmatch_kpshift_forward.1} parent=55 // pred_check_branch
        %718 = sbr.rel (%p716) target = $region60
      $region59: #{larmatch_kpshift_forward.1} parent=55 // pred_region
        %p719 = scmp.lt.s32.totalorder %s24, 1
        %s720 = scalar_select %p719, %s24, 1
        %p721 = scmp.lt.s32.totalorder %s25, 0
        %s722 = scalar_select %p721, %s25, 0
        %s723 = sadd.s32 %s722, %s720
        %s724 = smul.addr %s723, 4
        %s725 = scalar_lea.vmem %s7, %s724
      $region60: #{larmatch_kpshift_forward.1} parent=55 // pred_fallthru
        _
    $region56: #{larmatch_kpshift_forward.1} parent=5 // pred_fallthru
      _
  $region6: #{larmatch_kpshift_forward.1} parent=0 // loop_footer
    %s17 = sadd.s32 1, %s13
  $region7: #{larmatch_kpshift_forward.1} parent=0 // loop_footer_branch
    %12 = sbr.rel target = $region3
  $region8: #{larmatch_kpshift_forward.1} parent=0 // loop_exit
    _

</llo_original>
